<compile_context>
chip_gen: v6e
topology: v6e:2x2x1
jax: 0.10.0
libtpu: 0.0.40
codegen_flags: <defaults>
</compile_context>

<pallas_src>
import functools

import jax
import jax.numpy as jnp
from jax.experimental import pallas as pl
from jax.experimental.pallas import tpu as pltpu


def _round_up(x, m):
    return ((x + m - 1) // m) * m


def _tile_config():
    """Generation-aware (row_tile, k_tile, scoped_vmem_bytes)."""
    try:
        cap = getattr(pltpu.get_tpu_info(), "vmem_capacity_bytes",
                      128 * 1024 * 1024)
    except Exception:  # pragma: no cover - fallback if query unavailable
        cap = 128 * 1024 * 1024
    if cap <= 64 * 1024 * 1024:
        # v7x-class: 64 MiB per TC; leave headroom for Mosaic internal scratch.
        return 512, 1024, 48 * 1024 * 1024
    # v5e / v6e: 128 MiB physical VMEM -> bigger A row tiles, higher limit.
    return 1024, 2048, 100 * 1024 * 1024


def rgcn_layer_kernel(a_ref, xw_ref, b_ref, o_ref, acc_ref, *, apply_relu):
    """One (row-tile, K-tile) step of  O = A_hor @ XW + b (+ReLU)."""
    k = pl.program_id(1)

    @pl.when(k == 0)
    def _init():
        acc_ref[...] = jnp.zeros_like(acc_ref)

    # bf16 operands, f32 MXU accumulation.
    acc_ref[...] += jnp.dot(a_ref[...], xw_ref[...],
                            preferred_element_type=jnp.float32)

    @pl.when(k == pl.num_programs(1) - 1)
    def _finalize():
        h = acc_ref[...] + b_ref[...]
        if apply_relu:
            h = jnp.maximum(h, 0.0)
        o_ref[...] = h.astype(o_ref.dtype)


def rgcn_layer(a_p, xw_p, bias_p, *, tm, tk, vmem_limit, apply_relu, out_dtype):
    """out = A_hor_padded @ XW_padded + bias (+ReLU); all inputs pre-padded."""
    n_p, rn_p = a_p.shape
    f_out_p = xw_p.shape[1]
    grid = (n_p // tm, rn_p // tk)

    kernel = functools.partial(rgcn_layer_kernel, apply_relu=apply_relu)

    return pl.pallas_call(
        kernel,
        out_shape=jax.ShapeDtypeStruct((n_p, f_out_p), out_dtype),
        grid_spec=pltpu.PrefetchScalarGridSpec(
            num_scalar_prefetch=0,
            grid=grid,                                        # (row tiles, K tiles)
            in_specs=[
                pl.BlockSpec((tm, tk), lambda i, k: (i, k)),        # A tile (bf16)
                pl.BlockSpec((tk, f_out_p), lambda i, k: (k, 0)),   # XW tile (bf16)
                pl.BlockSpec((1, f_out_p), lambda i, k: (0, 0)),    # bias (resident)
            ],
            out_specs=pl.BlockSpec((tm, f_out_p), lambda i, k: (i, 0)),
            scratch_shapes=[pltpu.VMEM((tm, f_out_p), jnp.float32)],  # f32 acc
        ),
        compiler_params=pltpu.CompilerParams(
            dimension_semantics=("parallel", "arbitrary"),
            vmem_limit_bytes=vmem_limit),
    )(a_p, xw_p, bias_p)


def rgcn_forward(a_hor, features, w1, b1, w2, b2):
    n, rn = a_hor.shape
    r = rn // n
    hidden = w1.shape[2]
    numcls = w2.shape[2]

    tm_target, tk_target, vmem_limit = _tile_config()

    # --- padded geometry (no silent full-array fallback) ---------------------
    tm = min(tm_target, _round_up(n, 16))        # bf16 sublane packing: 16 rows
    n_p = _round_up(n, tm)
    tk = min(tk_target, _round_up(rn, 128))      # lane-aligned K tiles
    rn_p = _round_up(rn, tk)

    # --- one-time bf16 cast + pad of the adjacency (shared by both layers) ---
    a_p = jnp.pad(a_hor, ((0, n_p - n), (0, rn_p - rn))).astype(jnp.bfloat16)

    # --- layer 1: relu( sum_r (A_r @ X) @ W1_r + b1 ) -------------------------
    f1_p = _round_up(hidden, 128)
    # Grid-invariant stacked projection, precomputed once outside the kernel.
    xw1 = jnp.einsum('nf,rfe->rne', features.astype(jnp.float32),
                     w1.astype(jnp.float32)).reshape(rn, hidden)
    xw1 = jnp.pad(xw1, ((0, rn_p - rn), (0, f1_p - hidden))).astype(jnp.bfloat16)
    b1_p = jnp.pad(b1.astype(jnp.float32), (0, f1_p - hidden)).reshape(1, f1_p)

    h_p = rgcn_layer(a_p, xw1, b1_p, tm=tm, tk=tk, vmem_limit=vmem_limit,
                     apply_relu=True, out_dtype=jnp.bfloat16)
    h = h_p[:n, :hidden]                          # bf16; only feeds a bf16 matmul

    # --- layer 2: sum_r (A_r @ h) @ W2_r + b2  (link_prediction == False) ----
    f2_p = _round_up(numcls, 128)
    xw2 = jnp.einsum('ne,rec->rnc', h.astype(jnp.float32),
                     w2.astype(jnp.float32)).reshape(rn, numcls)
    xw2 = jnp.pad(xw2, ((0, rn_p - rn), (0, f2_p - numcls))).astype(jnp.bfloat16)
    b2_p = jnp.pad(b2.astype(jnp.float32), (0, f2_p - numcls)).reshape(1, f2_p)

    out_p = rgcn_layer(a_p, xw2, b2_p, tm=tm, tk=tk, vmem_limit=vmem_limit,
                       apply_relu=False, out_dtype=jnp.float32)
    return out_p[:n, :numcls]


def rgcn_forward_ref(a_stacked, features, w1, b1, w2, b2):
    """Pure-JAX f32 reference with identical semantics (for verification)."""
    h = jnp.einsum('rij,jf->rif', a_stacked, features)
    h = jnp.einsum('rif,rfe->ie', h, w1)
    h = jax.nn.relu(h + b1)
    h = jnp.einsum('rij,je->rie', a_stacked, h)
    h = jnp.einsum('rie,rec->ic', h, w2)
    return h + b2


if __name__ == "__main__":
    key = jax.random.PRNGKey(0)
    n = 32           # number of entities
    r_orig = 3       # number of relations (before enrich)
    insize = 16      # input feature dim
    hidden = 32      # hidden dim
    numcls = 8       # number of classes
    num_triples = 64
    r_total = 2 * r_orig + 1  # relations + inverses + self-loop

    k1, k2, k3, k4, k5, k6 = jax.random.split(key, 6)

    # synthetic triples + enrich(): add inverse relations and self-loops
    s = jax.random.randint(k1, (num_triples,), 0, n)
    p = jax.random.randint(k2, (num_triples,), 0, r_orig)
    o = jax.random.randint(k3, (num_triples,), 0, n)
    triples = jnp.stack([s, p, o], axis=1)
    inverse = jnp.stack([o, p + r_orig, s], axis=1)
    loop_ids = jnp.arange(n)
    self_loops = jnp.stack(
        [loop_ids, jnp.full((n,), 2 * r_orig, jnp.int32), loop_ids], axis=1)
    triples = jnp.concatenate([triples, inverse, self_loops], axis=0)

    # dense adjacency with the same row normalization as sum_sparse
    # (each (relation, subject) row sums to 1).
    # TODO(synk): original uses torch sparse COO tensors; densified here since
    # Pallas TPU has no sparse-COO matmul primitive.
    rows = triples[:, 1] * n + triples[:, 0]
    cols = triples[:, 2]
    a = jnp.zeros((r_total * n, n), jnp.float32).at[rows, cols].add(1.0)
    rowsum = a.sum(axis=1, keepdims=True)
    a = a / jnp.where(rowsum == 0, 1.0, rowsum)
    a_stacked = a.reshape(r_total, n, n)                       # "vertical" layout
    # "horizontal" layout: a_hor[i, p*n + j] = A_p[i, j]
    a_hor = a_stacked.transpose(1, 0, 2).reshape(n, r_total * n)

    # deterministic xavier-uniform-style init (gain = sqrt(2), calculate_gain('relu'))
    def xavier(k, shape, fan_in, fan_out):
        bound = jnp.sqrt(2.0) * jnp.sqrt(6.0 / (fan_in + fan_out))
        return jax.random.uniform(k, shape, jnp.float32, -bound, bound)

    w1 = xavier(k4, (r_total, insize, hidden), insize * hidden, r_total * hidden)
    w2 = xavier(k5, (r_total, hidden, numcls), hidden * numcls, r_total * numcls)
    b1 = jnp.zeros((hidden,), jnp.float32)
    b2 = jnp.zeros((numcls,), jnp.float32)
    features = jax.random.normal(k6, (n, insize), jnp.float32)

    out = rgcn_forward(a_hor, features, w1, b1, w2, b2)
    out = jax.block_until_ready(out)

    ref = rgcn_forward_ref(a_stacked, features, w1, b1, w2, b2)
    assert out.shape == (n, numcls)
    # bf16 adjacency / XW / inter-layer h streaming -> loosened tolerance vs f32 ref.
    assert jnp.allclose(out, ref, atol=5e-2, rtol=5e-2), "mismatch vs reference"
    print("KERNEL_OK")
</pallas_src>

<mosaic_0001>
module attributes {stable_mosaic.version = 11 : i64} {
  func.func @rgcn_layer_kernel(%arg0: i32, %arg1: i32, %arg2: memref<32x256xbf16, #tpu.memory_space<vmem>>, %arg3: memref<256x128xbf16, #tpu.memory_space<vmem>>, %arg4: memref<1x128xf32, #tpu.memory_space<vmem>>, %arg5: memref<32x128xbf16, #tpu.memory_space<vmem>>, %arg6: memref<32x128xf32, #tpu.memory_space<vmem>>) attributes {dimension_semantics = [#tpu.dimension_semantics<parallel>, #tpu.dimension_semantics<arbitrary>], iteration_bounds = array<i64: 1, 1>, scalar_prefetch = 0 : i64, scratch_operands = 1 : i64, tpu.core_type = #tpu.core_type<tc>, window_params = [{transform_indices = @transform_0, window_bounds = array<i64: 32, 256>}, {transform_indices = @transform_1, window_bounds = array<i64: 256, 128>}, {pipeline_mode = #tpu.pipeline_mode<synchronous>, transform_indices = @transform_2, window_bounds = array<i64: 1, 128>}, {transform_indices = @transform_3, window_bounds = array<i64: 32, 128>}]} {
    %c0_i32 = arith.constant 0 : i32
    %0 = arith.cmpi eq, %arg1, %c0_i32 : i32
    %1 = arith.extui %0 : i1 to i32
    %c0_i32_0 = arith.constant 0 : i32
    %2 = arith.cmpi ne, %1, %c0_i32_0 : i32
    scf.if %2 {
      %cst_10 = arith.constant 0.000000e+00 : f32
      %12 = vector.broadcast %cst_10 : f32 to vector<32x128xf32>
      %c0_11 = arith.constant 0 : index
      %c0_12 = arith.constant 0 : index
      %13 = vector.load %arg6[%c0_11, %c0_12] : memref<32x128xf32, #tpu.memory_space<vmem>>, vector<32x128xf32>
      tpu.vector_store %arg6[%c0_11, %c0_12], %12 {strides = array<i32>} : memref<32x128xf32, #tpu.memory_space<vmem>>, vector<32x128xf32>,
    } else {
    }
    %c0 = arith.constant 0 : index
    %c0_1 = arith.constant 0 : index
    %3 = vector.load %arg6[%c0, %c0_1] : memref<32x128xf32, #tpu.memory_space<vmem>>, vector<32x128xf32>
    %c0_2 = arith.constant 0 : index
    %c0_3 = arith.constant 0 : index
    %4 = vector.load %arg2[%c0_2, %c0_3] : memref<32x256xbf16, #tpu.memory_space<vmem>>, vector<32x256xbf16>
    %c0_4 = arith.constant 0 : index
    %c0_5 = arith.constant 0 : index
    %5 = vector.load %arg3[%c0_4, %c0_5] : memref<256x128xbf16, #tpu.memory_space<vmem>>, vector<256x128xbf16>
    %cst = arith.constant dense<0.000000e+00> : vector<32x128xf32>
    %6 = tpu.matmul %4, %5, %cst {dimension_numbers = #tpu.dot_dimension_numbers<[1], [0], [0], [1], [0, 0, 1, 1], [], []>} : vector<32x256xbf16>, vector<256x128xbf16>, vector<32x128xf32> -> vector<32x128xf32>
    %7 = arith.addf %3, %6 : vector<32x128xf32>
    %c0_6 = arith.constant 0 : index
    %c0_7 = arith.constant 0 : index
    %8 = vector.load %arg6[%c0_6, %c0_7] : memref<32x128xf32, #tpu.memory_space<vmem>>, vector<32x128xf32>
    tpu.vector_store %arg6[%c0_6, %c0_7], %7 {strides = array<i32>} : memref<32x128xf32, #tpu.memory_space<vmem>>, vector<32x128xf32>,
    %c0_i32_8 = arith.constant 0 : i32
    %9 = arith.cmpi eq, %arg1, %c0_i32_8 : i32
    %10 = arith.extui %9 : i1 to i32
    %c0_i32_9 = arith.constant 0 : i32
    %11 = arith.cmpi ne, %10, %c0_i32_9 : i32
    scf.if %11 {
      %c0_10 = arith.constant 0 : index
      %c0_11 = arith.constant 0 : index
      %12 = vector.load %arg6[%c0_10, %c0_11] : memref<32x128xf32, #tpu.memory_space<vmem>>, vector<32x128xf32>
      %c0_12 = arith.constant 0 : index
      %c0_13 = arith.constant 0 : index
      %13 = vector.load %arg4[%c0_12, %c0_13] : memref<1x128xf32, #tpu.memory_space<vmem>>, vector<1x128xf32>
      %14 = vector.broadcast %13 : vector<1x128xf32> to vector<32x128xf32>
      %15 = arith.addf %12, %14 : vector<32x128xf32>
      %cst_14 = arith.constant 0.000000e+00 : f32
      %16 = vector.broadcast %cst_14 : f32 to vector<32x128xf32>
      %17 = arith.maximumf %15, %16 : vector<32x128xf32>
      %18 = arith.truncf %17 : vector<32x128xf32> to vector<32x128xbf16>
      %c0_15 = arith.constant 0 : index
      %c0_16 = arith.constant 0 : index
      %19 = vector.load %arg5[%c0_15, %c0_16] : memref<32x128xbf16, #tpu.memory_space<vmem>>, vector<32x128xbf16>
      tpu.vector_store %arg5[%c0_15, %c0_16], %18 {strides = array<i32>} : memref<32x128xbf16, #tpu.memory_space<vmem>>, vector<32x128xbf16>,
    } else {
    }
    return
  }
  func.func @transform_0(%arg0: i32, %arg1: i32) -> (i32, i32) {
    %c0_i32 = arith.constant 0 : i32
    return %arg0, %arg1 : i32, i32
  }
  func.func @transform_1(%arg0: i32, %arg1: i32) -> (i32, i32) {
    %c0_i32 = arith.constant 0 : i32
    %c0_i32_0 = arith.constant 0 : i32
    return %arg1, %c0_i32 : i32, i32
  }
  func.func @transform_2(%arg0: i32, %arg1: i32) -> (i32, i32) {
    %c0_i32 = arith.constant 0 : i32
    %c0_i32_0 = arith.constant 0 : i32
    %c0_i32_1 = arith.constant 0 : i32
    return %c0_i32, %c0_i32_0 : i32, i32
  }
  func.func @transform_3(%arg0: i32, %arg1: i32) -> (i32, i32) {
    %c0_i32 = arith.constant 0 : i32
    %c0_i32_0 = arith.constant 0 : i32
    return %arg0, %c0_i32 : i32, i32
  }
}

</mosaic_0001>

<llo_original>
// kernel: tpu_custom_call.1
$region0: #{tpu_custom_call.1}
  #allocation0 [shape = 'u32[]', space=smem, size = 0x4, offset = 0x4, fixed_abs, tag = 'smem constant byte address 0x4 - core index']
  #allocation1 [shape = 'u32[144,128]{1,0:T(1,128)}', space=vmem, size = 0x12000, scoped, tag = 'internal scratch']
  #allocation2 [shape = 'f32[32,128]{1,0:T(8,128)}', space=vmem, size = 0x4000, scoped, tag = 'scratch operand']
  %s0 = inlined_call_operand.hbm [shape: bf16[32,256], index: 0, kind: input, shape index: {}]
  %s1 = inlined_call_operand.hbm [shape: bf16[256,128], index: 1, kind: input, shape index: {}]
  %s2 = inlined_call_operand.vmem [shape: f32[1,128], index: 2, kind: input, shape index: {}]
  %s3 = inlined_call_operand.hbm [shape: bf16[32,128], index: 3, kind: output, shape index: {}]
  %s4 = sld [smem:[#allocation0]]
  $region38: #{tpu_custom_call.1} parent=0
    _
  %s6 = ssub.s32 1, %s4
  %s7 = scalar_select 0, %s6, %s4
  $region1: #{tpu_custom_call.1} parent=0
    #allocation3 [shape = 'u8[16384]{0}', space=vmem, size = 0x4000, scoped, tag = 'input window, operand 0, single buffered']
    #allocation4 [shape = 's32[1]{0}', space=sflag, size = 0x4, scoped, tag = 'scoped memory for tpu_custom_call.1']
    #allocation5 [shape = 's32[1]{0}', space=sflag, size = 0x4, scoped, tag = 'scoped memory for tpu_custom_call.1']
    #allocation6 [shape = 'u8[65536]{0}', space=vmem, size = 0x10000, scoped, tag = 'input window, operand 1, single buffered']
    #allocation7 [shape = 's32[1]{0}', space=sflag, size = 0x4, scoped, tag = 'scoped memory for tpu_custom_call.1']
    #allocation8 [shape = 'u8[8192]{0}', space=vmem, size = 0x2000, scoped, tag = 'output window, operand 0, single buffered']
    %8 = vsyncpa [#allocation4], 0
    %9 = vsyncpa [#allocation7], 0
    %10 = vsyncpa [#allocation5], 0
    // Predicated region
    $region2: #{tpu_custom_call.1} parent=1 // pred_check
      _
    $region3: #{tpu_custom_call.1} parent=1 // pred_check_branch
      %12 = sbr.rel (0) target = $region5
    $region4: #{tpu_custom_call.1} parent=1 // pred_region
      %s14 = ssub.s32 512, 512
      %15 = vsyncadd [#allocation4], %s14
      %s16 = sshll.u32 [#allocation3], 4
      %s17 = int_to_ptr.vmem [resolvable:$true] %s16
      %22 = dma.hbm_to_vmem [thread:$0]  %s0, 512, %s17, [#allocation4], 128, 128, 8
    $region5: #{tpu_custom_call.1} parent=1 // pred_fallthru
      _
    // Predicated region
    $region6: #{tpu_custom_call.1} parent=1 // pred_check
      _
    $region7: #{tpu_custom_call.1} parent=1 // pred_check_branch
      %24 = sbr.rel (0) target = $region9
    $region8: #{tpu_custom_call.1} parent=1 // pred_region
      %s26 = ssub.s32 2048, 2048
      %27 = vsyncadd [#allocation7], %s26
      %s28 = sshll.u32 [#allocation6], 4
      %s29 = int_to_ptr.vmem [resolvable:$true] %s28
      %34 = dma.hbm_to_vmem [thread:$0]  %s1, 2048, %s29, [#allocation7], 64, 64, 4
    $region9: #{tpu_custom_call.1} parent=1 // pred_fallthru
      _
    // Predicated region
    $region10: #{tpu_custom_call.1} parent=1 // pred_check
      _
    $region11: #{tpu_custom_call.1} parent=1 // pred_check_branch
      %36 = sbr.rel (0) target = $region13
    $region12: #{tpu_custom_call.1} parent=1 // pred_region
      _
    $region13: #{tpu_custom_call.1} parent=1 // pred_fallthru
      _
    // Predicated region
    $region14: #{tpu_custom_call.1} parent=1 // pred_check
      _
    $region15: #{tpu_custom_call.1} parent=1 // pred_check_branch
      %38 = sbr.rel (0) target = $region17
    $region16: #{tpu_custom_call.1} parent=1 // pred_region
      %39 = dma.done [#allocation4], 512
    $region17: #{tpu_custom_call.1} parent=1 // pred_fallthru
      _
    // Predicated region
    $region18: #{tpu_custom_call.1} parent=1 // pred_check
      _
    $region19: #{tpu_custom_call.1} parent=1 // pred_check_branch
      %41 = sbr.rel (0) target = $region21
    $region20: #{tpu_custom_call.1} parent=1 // pred_region
      %42 = dma.done [#allocation7], 2048
    $region21: #{tpu_custom_call.1} parent=1 // pred_fallthru
      _
    %p44 = scmp.eq.s32.totalorder 0, 0
    // Predicated region
    $region22: #{tpu_custom_call.1} parent=1 // pred_check
      %p45 = pneg %p44
    $region23: #{tpu_custom_call.1} parent=1 // pred_check_branch
      %47 = sbr.rel (%p45) target = $region25
    $region24: #{tpu_custom_call.1} parent=1 // pred_region
      %48 = vst [vmem:[#allocation2] sm:$0xff] 0.0
      %49 = vst [vmem:[#allocation2 + $0x8] sm:$0xff] 0.0
      %50 = vst [vmem:[#allocation2 + $0x10] sm:$0xff] 0.0
      %51 = vst [vmem:[#allocation2 + $0x18] sm:$0xff] 0.0
    $region25: #{tpu_custom_call.1} parent=1 // pred_fallthru
      _
    %v52 = vld [vmem:[#allocation2] sm:$0xff]
    %v53 = vld [vmem:[#allocation2 + $0x8] sm:$0xff]
    %v54 = vld [vmem:[#allocation2 + $0x10] sm:$0xff]
    %v55 = vld [vmem:[#allocation2 + $0x18] sm:$0xff]
    %v56 = vld [vmem:[#allocation3] sm:$0xff]
    %v57 = vld [vmem:[#allocation3 + $0x8] sm:$0xff]
    %v58 = vld [vmem:[#allocation3 + $0x10] sm:$0xff]
    %v59 = vld [vmem:[#allocation3 + $0x18] sm:$0xff]
    %v60 = vld [vmem:[#allocation6] sm:$0xf]
    %v61 = vld [vmem:[#allocation6 + $0x4] sm:$0xf]
    %v62 = vld [vmem:[#allocation6 + $0x8] sm:$0xf]
    %v63 = vld [vmem:[#allocation6 + $0xc] sm:$0xf]
    %v64 = vld [vmem:[#allocation6 + $0x10] sm:$0xf]
    %v65 = vld [vmem:[#allocation6 + $0x14] sm:$0xf]
    %v66 = vld [vmem:[#allocation6 + $0x18] sm:$0xf]
    %v67 = vld [vmem:[#allocation6 + $0x1c] sm:$0xf]
    %v68 = vld [vmem:[#allocation6 + $0x20] sm:$0xf]
    %v69 = vld [vmem:[#allocation6 + $0x24] sm:$0xf]
    %v70 = vld [vmem:[#allocation6 + $0x28] sm:$0xf]
    %v71 = vld [vmem:[#allocation6 + $0x2c] sm:$0xf]
    %v72 = vld [vmem:[#allocation6 + $0x30] sm:$0xf]
    %v73 = vld [vmem:[#allocation6 + $0x34] sm:$0xf]
    %v74 = vld [vmem:[#allocation6 + $0x38] sm:$0xf]
    %v75 = vld [vmem:[#allocation6 + $0x3c] sm:$0xf]
    %v76 = vld [vmem:[#allocation6 + $0x40] sm:$0xf]
    %v77 = vld [vmem:[#allocation6 + $0x44] sm:$0xf]
    %v78 = vld [vmem:[#allocation6 + $0x48] sm:$0xf]
    %v79 = vld [vmem:[#allocation6 + $0x4c] sm:$0xf]
    %v80 = vld [vmem:[#allocation6 + $0x50] sm:$0xf]
    %v81 = vld [vmem:[#allocation6 + $0x54] sm:$0xf]
    %v82 = vld [vmem:[#allocation6 + $0x58] sm:$0xf]
    %v83 = vld [vmem:[#allocation6 + $0x5c] sm:$0xf]
    %v84 = vld [vmem:[#allocation6 + $0x60] sm:$0xf]
    %v85 = vld [vmem:[#allocation6 + $0x64] sm:$0xf]
    %v86 = vld [vmem:[#allocation6 + $0x68] sm:$0xf]
    %v87 = vld [vmem:[#allocation6 + $0x6c] sm:$0xf]
    %v88 = vld [vmem:[#allocation6 + $0x70] sm:$0xf]
    %v89 = vld [vmem:[#allocation6 + $0x74] sm:$0xf]
    %v90 = vld [vmem:[#allocation6 + $0x78] sm:$0xf]
    %v91 = vld [vmem:[#allocation6 + $0x7c] sm:$0xf]
    %v96 = vunpack.c.l.b16 %v56
    %v97 = vunpack.c.h.b16 %v56
    %v98 = vunpack.c.l.b16 %v57
    %v99 = vunpack.c.h.b16 %v57
    %v100 = vunpack.c.l.b16 %v58
    %v101 = vunpack.c.h.b16 %v58
    %v102 = vunpack.c.l.b16 %v59
    %v103 = vunpack.c.h.b16 %v59
    %v104 = vpack.c.b16 %v98, %v96
    %v105 = vpack.c.b16 %v99, %v97
    %v106 = vpack.c.b16 %v102, %v100
    %v107 = vpack.c.b16 %v103, %v101
    %v144 = vunpack.c.l.b16 %v60
    %v145 = vunpack.c.l.b16 %v61
    %v146 = vunpack.c.l.b16 %v62
    %v147 = vunpack.c.l.b16 %v63
    %v148 = vunpack.c.l.b16 %v64
    %v149 = vunpack.c.l.b16 %v65
    %v150 = vunpack.c.l.b16 %v66
    %v151 = vunpack.c.l.b16 %v67
    %v152 = vunpack.c.l.b16 %v68
    %v153 = vunpack.c.l.b16 %v69
    %v154 = vunpack.c.l.b16 %v70
    %v155 = vunpack.c.l.b16 %v71
    %v156 = vunpack.c.l.b16 %v72
    %v157 = vunpack.c.l.b16 %v73
    %v158 = vunpack.c.l.b16 %v74
    %v159 = vunpack.c.l.b16 %v75
    %v160 = vunpack.c.l.b16 %v76
    %v161 = vunpack.c.l.b16 %v77
    %v162 = vunpack.c.l.b16 %v78
    %v163 = vunpack.c.l.b16 %v79
    %v164 = vunpack.c.l.b16 %v80
    %v165 = vunpack.c.l.b16 %v81
    %v166 = vunpack.c.l.b16 %v82
    %v167 = vunpack.c.l.b16 %v83
    %v168 = vunpack.c.l.b16 %v84
    %v169 = vunpack.c.l.b16 %v85
    %v170 = vunpack.c.l.b16 %v86
    %v171 = vunpack.c.l.b16 %v87
    %v172 = vunpack.c.l.b16 %v88
    %v173 = vunpack.c.l.b16 %v89
    %v174 = vunpack.c.l.b16 %v90
    %v175 = vunpack.c.l.b16 %v91
    %v176 = vpack.c.b16 %v145, %v144
    %v177 = vpack.c.b16 %v147, %v146
    %v178 = vpack.c.b16 %v149, %v148
    %v179 = vpack.c.b16 %v151, %v150
    %v180 = vpack.c.b16 %v153, %v152
    %v181 = vpack.c.b16 %v155, %v154
    %v182 = vpack.c.b16 %v157, %v156
    %v183 = vpack.c.b16 %v159, %v158
    %v184 = vpack.c.b16 %v161, %v160
    %v185 = vpack.c.b16 %v163, %v162
    %v186 = vpack.c.b16 %v165, %v164
    %v187 = vpack.c.b16 %v167, %v166
    %v188 = vpack.c.b16 %v169, %v168
    %v189 = vpack.c.b16 %v171, %v170
    %v190 = vpack.c.b16 %v173, %v172
    %v191 = vpack.c.b16 %v175, %v174
    %208 = vmatprep.subr.bf16.mxu0 0
    %209 = vmatpush1.bf16.msra.mxu0 %v183
    %210 = vmatprep.subr.bf16.mxu0 0
    %211 = vmatpush1.bf16.msra.mxu0 %v182
    %212 = vmatprep.subr.bf16.mxu0 0
    %213 = vmatpush1.bf16.msra.mxu0 %v181
    %214 = vmatprep.subr.bf16.mxu0 0
    %215 = vmatpush1.bf16.msra.mxu0 %v180
    %216 = vmatprep.subr.bf16.mxu0 0
    %217 = vmatpush1.bf16.msra.mxu0 %v179
    %218 = vmatprep.subr.bf16.mxu0 0
    %219 = vmatpush1.bf16.msra.mxu0 %v178
    %220 = vmatprep.subr.bf16.mxu0 0
    %221 = vmatpush1.bf16.msra.mxu0 %v177
    %222 = vmatprep.subr.bf16.mxu0 0
    %223 = vmatpush1.bf16.msra.mxu0 %v176
    %224 = vmatprep.subr.bf16.mxu0 0
    %225 = vmatpush2.bf16.msra.mxu0 %v191
    %226 = vmatprep.subr.bf16.mxu0 0
    %227 = vmatpush2.bf16.msra.mxu0 %v190
    %228 = vmatprep.subr.bf16.mxu0 0
    %229 = vmatpush2.bf16.msra.mxu0 %v189
    %230 = vmatprep.subr.bf16.mxu0 0
    %231 = vmatpush2.bf16.msra.mxu0 %v188
    %232 = vmatprep.subr.bf16.mxu0 0
    %233 = vmatpush2.bf16.msra.mxu0 %v187
    %234 = vmatprep.subr.bf16.mxu0 0
    %235 = vmatpush2.bf16.msra.mxu0 %v186
    %236 = vmatprep.subr.bf16.mxu0 0
    %237 = vmatpush2.bf16.msra.mxu0 %v185
    %238 = vmatprep.subr.bf16.mxu0 0
    %239 = vmatpush2.bf16.msra.mxu0 %v184
    %240 = vmatprep.mubr.bf16.mxu0 %v105
    %241 = vmatmul.mubr.bf16.gmra.mxu0 %v104
    %v242 = vpop.f32.mrf.mxu0
    %v243 = vadd.f32 0.0, %v242
    %v244 = vpop.f32.mrf.mxu0
    %v245 = vpop.f32.mrf.mxu0
    %v246 = vadd.f32 0.0, %v245
    %v247 = vpop.f32.mrf.mxu0
    %248 = vmatprep.mubr.bf16.mxu0 %v107
    %249 = vmatmul.mubr.bf16.gmra.mxu0 %v106
    %v250 = vpop.f32.mrf.mxu0
    %v251 = vadd.f32 0.0, %v250
    %v252 = vpop.f32.mrf.mxu0
    %v253 = vpop.f32.mrf.mxu0
    %v254 = vadd.f32 0.0, %v253
    %v255 = vpop.f32.mrf.mxu0
    %256 = vdwg.mxu0
    %v257 = vadd.f32 %v52, %v243
    %v258 = vadd.f32 %v53, %v246
    %v259 = vadd.f32 %v54, %v251
    %v260 = vadd.f32 %v55, %v254
    %261 = vst [vmem:[#allocation2] sm:$0xff] %v257
    %262 = vst [vmem:[#allocation2 + $0x8] sm:$0xff] %v258
    %263 = vst [vmem:[#allocation2 + $0x10] sm:$0xff] %v259
    %264 = vst [vmem:[#allocation2 + $0x18] sm:$0xff] %v260
    // Predicated region
    $region26: #{tpu_custom_call.1} parent=1 // pred_check
      %p265 = pneg %p44
    $region27: #{tpu_custom_call.1} parent=1 // pred_check_branch
      %267 = sbr.rel (%p265) target = $region29
    $region28: #{tpu_custom_call.1} parent=1 // pred_region
      %v268 = vld [vmem:[#allocation2] sm:$0xff]
      %v269 = vld [vmem:[#allocation2 + $0x8] sm:$0xff]
      %v270 = vld [vmem:[#allocation2 + $0x10] sm:$0xff]
      %v271 = vld [vmem:[#allocation2 + $0x18] sm:$0xff]
      %v272 = vld [vmem:[%s2] sm:$0x1]
      %v274 = vlaneseq
      %v275 = vshrl.u32 %v274, 7
      %v276 = vsub.s32 0, %v275
      %v277 = vrot.slane %v272, %v276
      %v279 = vadd.f32 %v268, %v277
      %v280 = vadd.f32 %v269, %v277
      %v281 = vadd.f32 %v270, %v277
      %v282 = vadd.f32 %v271, %v277
      %v283 = vmax.f32 %v279, 0.0
      %v284 = vmax.f32 %v280, 0.0
      %v285 = vmax.f32 %v281, 0.0
      %v286 = vmax.f32 %v282, 0.0
      %v287 = vpack.c.bf16 %v284, %v283
      %v288 = vpack.c.bf16 %v286, %v285
      %v291 = vunpack.c.l.b16 %v287
      %v292 = vunpack.c.h.b16 %v287
      %v293 = vunpack.c.l.b16 %v288
      %v294 = vunpack.c.h.b16 %v288
      %v295 = vpack.c.b16 %v291, %v291
      %v296 = vpack.c.b16 %v292, %v292
      %v297 = vpack.c.b16 %v293, %v293
      %v298 = vpack.c.b16 %v294, %v294
      %303 = vst [vmem:[#allocation8] sm:$0xf] %v295
      %304 = vst [vmem:[#allocation8 + $0x4] sm:$0xf] %v296
      %305 = vst [vmem:[#allocation8 + $0x8] sm:$0xf] %v297
      %306 = vst [vmem:[#allocation8 + $0xc] sm:$0xf] %v298
    $region29: #{tpu_custom_call.1} parent=1 // pred_fallthru
      _
    // Predicated region
    $region30: #{tpu_custom_call.1} parent=1 // pred_check
      _
    $region31: #{tpu_custom_call.1} parent=1 // pred_check_branch
      %308 = sbr.rel (0) target = $region33
    $region32: #{tpu_custom_call.1} parent=1 // pred_region
      %s310 = ssub.s32 256, 256
      %311 = vsyncadd [#allocation5], %s310
      %s312 = sshll.u32 [#allocation8], 4
      %s313 = int_to_ptr.vmem [resolvable:$true] %s312
      %318 = dma.vmem_to_hbm [thread:$0]  %s313, 256, %s3, [#allocation5], 64, 64, 4
    $region33: #{tpu_custom_call.1} parent=1 // pred_fallthru
      _
    // Predicated region
    $region34: #{tpu_custom_call.1} parent=1 // pred_check
      _
    $region35: #{tpu_custom_call.1} parent=1 // pred_check_branch
      %320 = sbr.rel (0) target = $region37
    $region36: #{tpu_custom_call.1} parent=1 // pred_region
      %321 = dma.done [#allocation5], 256
    $region37: #{tpu_custom_call.1} parent=1 // pred_fallthru
      _
    %322 = vsyncpa [#allocation4], 1
    %323 = vsyncpa [#allocation7], 1
    %324 = vsyncpa [#allocation5], 1

</llo_original>
